<compile_context>
chip_gen: v7x
topology: tpu7x:2x2x1
jax: 0.10.0
libtpu: 0.0.40
codegen_flags: <defaults>
</compile_context>

<pallas_src>
import functools
import numpy as np
import jax
import jax.numpy as jnp
from jax.experimental import pallas as pl
from jax.experimental.pallas import tpu as pltpu

RAY_BINS = 360

# ----------------------------------------------------------------------------
# Plain-JAX glue replacing the external `ops` module.
# TODO(synk): `ops.grid_helper` / `ops.binned_rays` are external; assumed semantics: a uniform grid
#             of centers inside bbox, Euclidean distance + atan2 bearing, and a deterministic
#             360-bin (3, H, W) ray table indexed by rounded degrees (mod 360).
# ----------------------------------------------------------------------------
def binned_rays(height, width):
    deg = jnp.arange(RAY_BINS, dtype=jnp.float32)[:, None, None]
    hh = jnp.arange(height, dtype=jnp.float32)[None, :, None]
    ww = jnp.arange(width, dtype=jnp.float32)[None, None, :]
    az = 2.0 * jnp.pi * ww / width + jnp.deg2rad(deg)
    el = jnp.pi * (hh + 0.5) / height - jnp.pi / 2.0
    r0 = jnp.cos(el) * jnp.cos(az)
    r1 = jnp.cos(el) * jnp.sin(az)
    r2 = jnp.broadcast_to(jnp.sin(el), r0.shape)
    return jnp.stack([r0, r1, r2], axis=1).astype(jnp.float32)  # (360, 3, H, W)


def grid_helper(bbox, near_locs, grid_size):
    # bbox: (4,) = [x0, y0, x1, y1]; near_locs: (NN, 2)
    xs = jnp.linspace(bbox[0], bbox[2], grid_size)
    ys = jnp.linspace(bbox[1], bbox[3], grid_size)
    gx, gy = jnp.meshgrid(xs, ys, indexing="ij")
    locs = jnp.stack([gx.reshape(-1), gy.reshape(-1)], axis=-1)        # (NL, 2)
    diff = near_locs[None, :, :] - locs[:, None, :]                    # (NL, NN, 2)
    d = jnp.sqrt(jnp.sum(diff * diff, axis=-1))
    theta = jnp.arctan2(diff[..., 1], diff[..., 0])
    return d, theta


def _geometry(bbox, near_locs, grid_size):
    """Distances and 360-bin bearing indices per (batch, grid-loc, neighbor)."""
    D, theta = jax.vmap(lambda bb, nl: grid_helper(bb, nl, grid_size))(bbox, near_locs)
    inds = jnp.mod(jnp.round(jnp.rad2deg(theta)).astype(jnp.int32), RAY_BINS)
    return D.astype(jnp.float32), inds                                 # (B, NL, NN) each


# ----------------------------------------------------------------------------
# Block-circulant representation of a circular 'same' 2-D conv on the HxW torus.
# ----------------------------------------------------------------------------
def _circulant_conv_matrix(w_conv, H, W):
    """w_conv: (1, C, k, k). Returns K of shape (C*H*W, H*W): (x_flat @ K) == circular conv(x)."""
    C, k = int(w_conv.shape[1]), int(w_conv.shape[2])
    p = (k - 1) // 2
    base = jnp.zeros((C, H, W), jnp.float32).at[:, :k, :k].set(w_conv[0].astype(jnp.float32))
    hi = np.arange(H)
    wi = np.arange(W)
    dh = (hi[:, None] - hi[None, :] + p) % H                 # (H_in, H_out)
    dw = (wi[:, None] - wi[None, :] + p) % W                 # (W_in, W_out)
    K = base[:, dh[:, None, :, None], dw[None, :, None, :]]  # (C, H_in, W_in, H_out, W_out)
    return K.reshape(C * H * W, H * W)


# ----------------------------------------------------------------------------
# Pallas kernel: joint softmax over (neighbor, H, W) + attention-weighted feature pooling.
# ----------------------------------------------------------------------------
def _softmax_pool_kernel(logits_ref, pano_ref, feats_ref, grid_ref, weight_ref):
    # logits_ref: (bt, tl, X)  f32   base logits = orientation-lookup + distance term + fused bias
    # pano_ref:   (bt, 1,  X)  f32   grid-location-invariant panorama conv contribution
    # feats_ref:  (bt, NF, X)  bf16  neighbor features, feature-major (lane-dense X = NN*H*W)
    # grid_ref:   (bt, NF, tl) f32   attention-pooled grid features (lane-dense tl)
    # weight_ref: (bt, tl, X)  f32   softmax attention weights (lane-dense X)
    x = logits_ref[...] + pano_ref[...]               # sublane broadcast over the tl locations
    m = jnp.max(x, axis=-1, keepdims=True)
    e = jnp.exp(x - m)
    s = jnp.sum(e, axis=-1, keepdims=True)
    r = pl.reciprocal(s, approx=True)                 # EUP slot (off the VALU)
    r = r * (2.0 - s * r)                             # one Newton step -> ~exact f32 reciprocal
    w = e * r
    weight_ref[...] = w
    # 'pxyf,spxy->sf' per batch element: contract the NN*H*W axis on the MXU, bf16 in / f32 acc.
    grid_ref[...] = jnp.einsum('bfx,blx->bfl', feats_ref[...], w.astype(jnp.bfloat16),
                               preferred_element_type=jnp.float32)


def _pick_tiles(B, NL, NN, HW, NF):
    """(batch tile, grid-location tile, vmem_limit_bytes) from the detected VMEM capacity."""
    X = NN * HW
    try:
        vmem_cap = int(pltpu.get_tpu_info().vmem_capacity_bytes)
    except Exception:                       # query unavailable: assume v7x's 64 MiB per core
        vmem_cap = 64 << 20
    budget = int(vmem_cap * 0.55)           # headroom for compiler scratch / semaphores
    vmem_limit = min(int(vmem_cap * 0.85), 100 << 20)

    # Per (batch, grid-loc): logits in + weights out (f32, double-buffered) + ~2 f32 temporaries.
    per_loc = X * 4 * (2 + 2 + 2)
    # Per batch element: bf16 feature matrix + f32 grid output (both double-buffered) + pano row.
    per_batch = NF * X * 2 * 2 + NF * NL * 4 * 2 + X * 4 * 2

    # Batch tile: largest divisor of B that keeps >= 2 steps on the (parallel) batch axis.
    bt = 1
    for cand in range(min(B, 8), 0, -1):
        if B % cand == 0 and (B // cand >= 2 or B == 1):
            bt = cand
            break

    def fits(t):
        return bt * (per_batch + t * per_loc) <= budget

    # Location tile: tl == NL, or a multiple of 128 so the lane-dense (bt, NF, tl) output block and
    # the (bt, tl, X) blocks stay (8,128)-aligned.
    tl = NL
    if not fits(NL):
        cands = [t for t in range(128, NL, 128) if NL % t == 0 and fits(t)]
        if cands:
            tl = max(cands)
        else:
            for d in sorted([d for d in range(1, bt + 1) if B % d == 0], reverse=True):
                bt = d
                if fits(NL):
                    break
            tl = NL
    return bt, tl, vmem_limit


@functools.partial(jax.jit, static_argnames=("grid_size",))
def grid_v2_forward(bbox, near_locs, near_feats, params, rays, grid_size):
    """Equivalent of GridV2.forward with overhead_feat=None."""
    B, NN, NF, H, W = near_feats.shape
    HW = H * W
    X = NN * HW
    NL = grid_size * grid_size
    w1, b1, w2, b2, wf, bf = params
    wf0 = wf[0, 0, 0, 0].astype(jnp.float32)
    wf1 = wf[0, 1, 0, 0].astype(jnp.float32)

    # Fold the 1x1 finalconv into the two circular convs; split per input-channel group.
    K1 = _circulant_conv_matrix(w1, H, W)                     # (6*HW, HW)
    K2 = _circulant_conv_matrix(w2, H, W)                     # (6*HW, HW)
    Kc = wf0 * K1 + wf1 * K2
    ko = Kc[HW:4 * HW]                                        # orientation channels (1..3)
    kp = Kc[4 * HW:]                                          # panorama channels (4..5)
    dist_coef = wf0 * jnp.sum(w1[0, 0]) + wf1 * jnp.sum(w2[0, 0])
    bias = wf0 * b1[0] + wf1 * b2[0] + bf[0]

    # Geometry (glue): distances + 360-bin bearing indices.
    D, inds = _geometry(bbox, near_locs, grid_size)           # (B, NL, NN) f32 / int32

    # Orientation conv == 360-row lookup table, built once per call (tiny, exact f32).
    R = jnp.dot(rays.reshape(RAY_BINS, 3 * HW).astype(jnp.float32), ko,
                precision=jax.lax.Precision.HIGHEST)          # (360, HW)

    # Base logits = orientation lookup + analytic distance conv + fused bias, assembled in one XLA
    # fusion; the (B, NL, NN*HW) array is written once here and read once by the kernel.
    # TODO(synk): the gather could move in-kernel (scalar-prefetched indices + one-hot MXU gather of
    #             the VMEM-resident R) to remove this stream entirely; kept in glue for robustness.
    base = (R[inds] + (D * dist_coef + bias)[..., None]).reshape(B, NL, X).astype(jnp.float32)

    # Panorama conv contribution: grid-location invariant, computed once per (batch, neighbor).
    feats32 = near_feats.astype(jnp.float32)
    x_p = jnp.concatenate([jnp.max(feats32, axis=2).reshape(B, NN, HW),
                           jnp.mean(feats32, axis=2).reshape(B, NN, HW)], axis=-1)  # (B, NN, 2*HW)
    pano = jnp.einsum('bnk,kh->bnh', x_p, kp,
                      precision=jax.lax.Precision.HIGHEST).reshape(B, 1, X).astype(jnp.float32)

    # Feature-major, lane-dense, bf16 features for the in-kernel MXU reduction.
    feats_fm = near_feats.transpose(0, 2, 1, 3, 4).reshape(B, NF, X).astype(jnp.bfloat16)

    bt, tl, vmem_limit = _pick_tiles(B, NL, NN, HW, NF)
    grid = (B // bt, NL // tl)

    # TODO(synk): on v5e (HBM-bound) the attention-weight output could be emitted in bf16 if the
    #             consumer allows; kept f32 here to match the reference module exactly.
    grid_fm, weight = pl.pallas_call(
        _softmax_pool_kernel,
        out_shape=(jax.ShapeDtypeStruct((B, NF, NL), jnp.float32),
                   jax.ShapeDtypeStruct((B, NL, X), jnp.float32)),
        grid=grid,
        in_specs=[pl.BlockSpec((bt, tl, X), lambda ib, il: (ib, il, 0)),   # base logits (f32)
                  pl.BlockSpec((bt, 1, X), lambda ib, il: (ib, 0, 0)),     # pano contribution
                  pl.BlockSpec((bt, NF, X), lambda ib, il: (ib, 0, 0))],   # features (bf16)
        out_specs=(pl.BlockSpec((bt, NF, tl), lambda ib, il: (ib, 0, il)),   # lane-dense grid feats
                   pl.BlockSpec((bt, tl, X), lambda ib, il: (ib, il, 0))),   # lane-dense weights
        compiler_params=pltpu.CompilerParams(
            dimension_semantics=("parallel", "parallel"),
            vmem_limit_bytes=vmem_limit),
    )(base, pano, feats_fm)

    grid_feats = grid_fm.transpose(0, 2, 1).reshape(B, grid_size, grid_size, NF)
    attention = weight.reshape(B, grid_size, grid_size, NN, H, W)
    return grid_feats, attention


# ----------------------------------------------------------------------------
# Pure-JAX reference (independent path: jnp.roll convs + jax.nn.softmax + einsum).
# ----------------------------------------------------------------------------
@functools.partial(jax.jit, static_argnames=("grid_size",))
def reference_forward(bbox, near_locs, near_feats, params, rays, grid_size):
    w1, b1, w2, b2, wf, bf = params
    B, NN, NF, H, W = near_feats.shape
    NL = grid_size * grid_size
    D, inds = _geometry(bbox, near_locs, grid_size)
    orient = rays[inds]                                               # (B, NL, NN, 3, H, W)
    dist = jnp.broadcast_to(D[..., None, None], (B, NL, NN, H, W))
    feats32 = near_feats.astype(jnp.float32)
    pano_max = jnp.max(feats32, axis=2)
    pano_mean = jnp.mean(feats32, axis=2)
    chans = jnp.concatenate(
        [dist[:, :, :, None],
         orient,
         jnp.broadcast_to(pano_max[:, None, :, None], (B, NL, NN, 1, H, W)),
         jnp.broadcast_to(pano_mean[:, None, :, None], (B, NL, NN, 1, H, W))],
        axis=3)                                                       # (B, NL, NN, 6, H, W)

    def circ_conv(w, b, k):
        p = (k - 1) // 2
        out = jnp.zeros((B, NL, NN, H, W), jnp.float32) + b
        for c in range(6):
            for i in range(k):
                for j in range(k):
                    out = out + w[0, c, i, j] * jnp.roll(
                        chans[:, :, :, c], shift=(p - i, p - j), axis=(-2, -1))
        return out

    c1 = circ_conv(w1, b1[0], 3)
    c2 = circ_conv(w2, b2[0], 5)
    logits = wf[0, 0, 0, 0] * c1 + wf[0, 1, 0, 0] * c2 + bf[0]
    wgt = jax.nn.softmax(logits.reshape(B, NL, NN * H * W), axis=-1).reshape(logits.shape)
    gf = jnp.einsum("blnhw,bnfhw->blf", wgt, feats32,
                    precision=jax.lax.Precision.HIGHEST)
    return (gf.reshape(B, grid_size, grid_size, NF),
            wgt.reshape(B, grid_size, grid_size, NN, H, W))


if __name__ == "__main__":
    # Small shapes consistent with the module's conventions:
    #   batch=2, num_neighbors=4, num_feats=8, panorama H=8, W=32, grid_size=4 (-> 16 grid locs).
    B, NN, NF, H, W = 2, 4, 8, 8, 32
    GRID_SIZE = 4

    key = jax.random.PRNGKey(0)
    ks = jax.random.split(key, 10)

    # Deterministic synthetic parameters (GeoAttention: conv1 3x3, conv2 5x5, finalconv 1x1).
    w1 = 0.2 * jax.random.normal(ks[0], (1, 6, 3, 3), jnp.float32)
    b1 = 0.1 * jax.random.normal(ks[1], (1,), jnp.float32)
    w2 = 0.1 * jax.random.normal(ks[2], (1, 6, 5, 5), jnp.float32)
    b2 = 0.1 * jax.random.normal(ks[3], (1,), jnp.float32)
    wf = 0.5 * jax.random.normal(ks[4], (1, 2, 1, 1), jnp.float32)
    bf = 0.1 * jax.random.normal(ks[5], (1,), jnp.float32)
    params = (w1, b1, w2, b2, wf, bf)

    # Inputs (overhead_feat is None in this configuration).
    bbox = jnp.array([[0.0, 0.0, 1.0, 1.0],
                      [0.5, 0.5, 2.0, 1.5]], dtype=jnp.float32)            # (B, 4)
    near_locs = 2.0 * jax.random.uniform(ks[6], (B, NN, 2), jnp.float32)   # (B, NN, 2)
    near_feats = jax.random.normal(ks[7], (B, NN, NF, H, W), jnp.float32)  # (B, NN, NF, H, W)
    rays = binned_rays(H, W)                                               # (360, 3, H, W)

    grid_feats, attention = grid_v2_forward(bbox, near_locs, near_feats, params, rays, GRID_SIZE)
    jax.block_until_ready((grid_feats, attention))

    ref_grid, ref_attn = reference_forward(bbox, near_locs, near_feats, params, rays, GRID_SIZE)
    assert grid_feats.shape == (B, GRID_SIZE, GRID_SIZE, NF)
    assert attention.shape == (B, GRID_SIZE, GRID_SIZE, NN, H, W)
    # Attention weights stay on an f32 path (tight tolerance). grid_feats tolerance is relaxed
    # because the pooling matmul uses bf16 MXU operands with f32 accumulation (per perf review).
    np.testing.assert_allclose(np.asarray(attention), np.asarray(ref_attn), rtol=1e-3, atol=3e-5)
    np.testing.assert_allclose(np.asarray(grid_feats), np.asarray(ref_grid), rtol=2e-2, atol=5e-3)

    print("KERNEL_OK")
</pallas_src>

<mosaic_0001>
module attributes {stable_mosaic.version = 11 : i64} {
  func.func @_softmax_pool_kernel(%arg0: i32, %arg1: i32, %arg2: memref<1x16x1024xf32, #tpu.memory_space<vmem>>, %arg3: memref<1x1x1024xf32, #tpu.memory_space<vmem>>, %arg4: memref<1x8x1024xbf16, #tpu.memory_space<vmem>>, %arg5: memref<1x8x16xf32, #tpu.memory_space<vmem>>, %arg6: memref<1x16x1024xf32, #tpu.memory_space<vmem>>) attributes {dimension_semantics = [#tpu.dimension_semantics<parallel>, #tpu.dimension_semantics<parallel>], iteration_bounds = array<i64: 2, 1>, scalar_prefetch = 0 : i64, scratch_operands = 0 : i64, tpu.core_type = #tpu.core_type<tc>, window_params = [{transform_indices = @transform_0, window_bounds = array<i64: 1, 16, 1024>}, {transform_indices = @transform_1, window_bounds = array<i64: 1, 1, 1024>}, {transform_indices = @transform_2, window_bounds = array<i64: 1, 8, 1024>}, {transform_indices = @transform_3, window_bounds = array<i64: 1, 8, 16>}, {transform_indices = @transform_4, window_bounds = array<i64: 1, 16, 1024>}]} {
    %c0 = arith.constant 0 : index
    %c0_0 = arith.constant 0 : index
    %c0_1 = arith.constant 0 : index
    %0 = vector.load %arg2[%c0, %c0_0, %c0_1] : memref<1x16x1024xf32, #tpu.memory_space<vmem>>, vector<1x16x1024xf32>
    %c0_2 = arith.constant 0 : index
    %c0_3 = arith.constant 0 : index
    %c0_4 = arith.constant 0 : index
    %1 = vector.load %arg3[%c0_2, %c0_3, %c0_4] : memref<1x1x1024xf32, #tpu.memory_space<vmem>>, vector<1x1x1024xf32>
    %2 = vector.broadcast %1 : vector<1x1x1024xf32> to vector<1x16x1024xf32>
    %3 = arith.addf %0, %2 : vector<1x16x1024xf32>
    %cst = arith.constant dense<0xFF800000> : vector<1x16xf32>
    %4 = vector.multi_reduction <maximumf>, %3, %cst [2] : vector<1x16x1024xf32> to vector<1x16xf32>
    %5 = vector.shape_cast %4 : vector<1x16xf32> to vector<1x16x1xf32>
    %6 = vector.broadcast %5 : vector<1x16x1xf32> to vector<1x16x1024xf32>
    %7 = arith.subf %3, %6 : vector<1x16x1024xf32>
    %8 = math.exp %7 : vector<1x16x1024xf32>
    %cst_5 = arith.constant dense<0.000000e+00> : vector<1x16xf32>
    %9 = vector.multi_reduction <add>, %8, %cst_5 [2] : vector<1x16x1024xf32> to vector<1x16xf32>
    %10 = vector.shape_cast %9 : vector<1x16xf32> to vector<1x16x1xf32>
    %11 = tpu.reciprocal %10 {approx = true} : vector<1x16x1xf32> -> vector<1x16x1xf32>
    %12 = arith.mulf %10, %11 : vector<1x16x1xf32>
    %cst_6 = arith.constant 2.000000e+00 : f32
    %13 = vector.broadcast %cst_6 : f32 to vector<1x16x1xf32>
    %14 = arith.subf %13, %12 : vector<1x16x1xf32>
    %15 = arith.mulf %11, %14 : vector<1x16x1xf32>
    %16 = vector.broadcast %15 : vector<1x16x1xf32> to vector<1x16x1024xf32>
    %17 = arith.mulf %8, %16 : vector<1x16x1024xf32>
    %c0_7 = arith.constant 0 : index
    %c0_8 = arith.constant 0 : index
    %c0_9 = arith.constant 0 : index
    %18 = vector.load %arg6[%c0_7, %c0_8, %c0_9] : memref<1x16x1024xf32, #tpu.memory_space<vmem>>, vector<1x16x1024xf32>
    tpu.vector_store %arg6[%c0_7, %c0_8, %c0_9], %17 {strides = array<i32>} : memref<1x16x1024xf32, #tpu.memory_space<vmem>>, vector<1x16x1024xf32>,
    %c0_10 = arith.constant 0 : index
    %c0_11 = arith.constant 0 : index
    %c0_12 = arith.constant 0 : index
    %19 = vector.load %arg4[%c0_10, %c0_11, %c0_12] : memref<1x8x1024xbf16, #tpu.memory_space<vmem>>, vector<1x8x1024xbf16>
    %20 = arith.truncf %17 : vector<1x16x1024xf32> to vector<1x16x1024xbf16>
    "tpu.trace_start"() <{level = 10 : i32, message = "bfx,blx->bfl"}> : () -> ()
    %cst_13 = arith.constant dense<0.000000e+00> : vector<1x8x16xf32>
    %21 = tpu.matmul %19, %20, %cst_13 {dimension_numbers = #tpu.dot_dimension_numbers<[2], [2], [1], [1], [0, 0, 0, 1, 1, 1], [0], [0]>} : vector<1x8x1024xbf16>, vector<1x16x1024xbf16>, vector<1x8x16xf32> -> vector<1x8x16xf32>
    "tpu.trace_stop"() : () -> ()
    %c0_14 = arith.constant 0 : index
    %c0_15 = arith.constant 0 : index
    %c0_16 = arith.constant 0 : index
    %22 = vector.load %arg5[%c0_14, %c0_15, %c0_16] : memref<1x8x16xf32, #tpu.memory_space<vmem>>, vector<1x8x16xf32>
    tpu.vector_store %arg5[%c0_14, %c0_15, %c0_16], %21 {strides = array<i32>} : memref<1x8x16xf32, #tpu.memory_space<vmem>>, vector<1x8x16xf32>,
    return
  }
  func.func @transform_0(%arg0: i32, %arg1: i32) -> (i32, i32, i32) {
    %c0_i32 = arith.constant 0 : i32
    %c0_i32_0 = arith.constant 0 : i32
    return %arg0, %arg1, %c0_i32 : i32, i32, i32
  }
  func.func @transform_1(%arg0: i32, %arg1: i32) -> (i32, i32, i32) {
    %c0_i32 = arith.constant 0 : i32
    %c0_i32_0 = arith.constant 0 : i32
    %c0_i32_1 = arith.constant 0 : i32
    return %arg0, %c0_i32, %c0_i32_0 : i32, i32, i32
  }
  func.func @transform_2(%arg0: i32, %arg1: i32) -> (i32, i32, i32) {
    %c0_i32 = arith.constant 0 : i32
    %c0_i32_0 = arith.constant 0 : i32
    %c0_i32_1 = arith.constant 0 : i32
    return %arg0, %c0_i32, %c0_i32_0 : i32, i32, i32
  }
  func.func @transform_3(%arg0: i32, %arg1: i32) -> (i32, i32, i32) {
    %c0_i32 = arith.constant 0 : i32
    %c0_i32_0 = arith.constant 0 : i32
    return %arg0, %c0_i32, %arg1 : i32, i32, i32
  }
  func.func @transform_4(%arg0: i32, %arg1: i32) -> (i32, i32, i32) {
    %c0_i32 = arith.constant 0 : i32
    %c0_i32_0 = arith.constant 0 : i32
    return %arg0, %arg1, %c0_i32 : i32, i32, i32
  }
}

</mosaic_0001>

<llo_original>
// kernel: grid_v2_forward.1
$region0: #{grid_v2_forward.1}
  #allocation0 [shape = 'u32[]', space=smem, size = 0x4, offset = 0x4, fixed_abs, tag = 'smem constant byte address 0x4 - core index']
  #allocation1 [shape = 'u32[144,128]{1,0:T(1,128)}', space=vmem, size = 0x12000, scoped, tag = 'internal scratch']
  %s0 = inlined_call_operand.vmem [shape: f32[2,16,1024], index: 0, kind: input, shape index: {}]
  %s1 = inlined_call_operand.vmem [shape: f32[2,1,1024], index: 1, kind: input, shape index: {}]
  %s2 = inlined_call_operand.vmem [shape: bf16[2,8,1024], index: 2, kind: input, shape index: {}]
  %s3 = inlined_call_operand.vmem [shape: f32[2,8,16], index: 3, kind: output, shape index: {0}]
  %s4 = inlined_call_operand.vmem [shape: f32[2,16,1024], index: 4, kind: output, shape index: {1}]
  %5 = xla_tuple %s3, %s4
  %s6 = sld [smem:[#allocation0]]
  $region53: #{grid_v2_forward.1} parent=0
    _
  %s8 = ssub.s32 1, %s6
  %s9 = scalar_select 0, %s8, %s6
  loop: start=0, step=1, limit=4
  $region2: #{grid_v2_forward.1} parent=0 // loop_pre_header
    _
  $region3: #{grid_v2_forward.1} parent=0 // loop_header
    %s11 = sphi 0, %s15
    %p12 = scmp.ge.s32.totalorder %s11, 4
    %s18 = sphi 0, %s30
    %s19 = sphi 0, %s26
    %s20 = sphi 0, %s18
    %s21 = sphi 0, %s19
    %s22 = sphi 0, %s20
    %s23 = sphi 0, %s21
    %s35 = sphi 0, %s37
    %s38 = sphi 0, %s35
    %s39 = sphi 0, %s38
    %s55 = sphi 0, %s39
    %s61 = sphi 0, %s63
    %s64 = sphi 0, %s61
    %s65 = sphi 0, %s64
    %s81 = sphi 0, %s65
    %s87 = sphi 0, %s89
    %s90 = sphi 0, %s87
    %s91 = sphi 0, %s90
    %s107 = sphi 0, %s91
    %s115 = sphi 0, %s117
    %s118 = sphi 0, %s115
    %s119 = sphi 0, %s118
    %s135 = sphi 0, %s119
    %s143 = sphi 0, %s145
    %s146 = sphi 0, %s143
    %s147 = sphi 0, %s146
    %s163 = sphi 0, %s147
  $region4: #{grid_v2_forward.1} parent=0 // loop_header_branch
    %14 = sbr.rel (%p12) target = $region8
  $region5: #{grid_v2_forward.1} parent=0 // loop_body
    %s16 = ssub.s32 %s11, 1
    %s17 = ssub.s32 %s11, 2
    %s24 = sadd.s32 1, %s19
    %p25 = scmp.ge.s32.totalorder %s24, 1
    %s26 = scalar_select %p25, 0, %s24
    %s27 = sadd.s32 1, %s18
    %s28 = scalar_select %p25, %s27, %s18
    %p29 = scmp.ge.s32.totalorder %s28, 2
    %s30 = scalar_select %p29, 0, %s28
    %s31 = ssub.s32 %s18, %s30
    %s32 = ssub.s32 %s19, %s26
    %s33 = sor.u32 %s31, %s32
    %p34 = scmp.eq.s32.totalorder %s33, 0
    %s36 = sadd.s32 %s35, 1
    %s37 = scalar_select %p34, %s35, %s36
    %p40 = pneg %p34
    %p41 = scmp.eq.s32.totalorder %s11, 1
    %p42 = por %p40, %p41
    %p43 = scmp.ne.s32.totalorder %s35, %s38
    %p44 = scmp.eq.s32.totalorder %s11, 0
    %p45 = por %p43, %p44
    %p46 = scmp.ne.s32.totalorder %s35, %s38
    %p47 = scmp.eq.s32.totalorder %s16, 1
    %p48 = por %p46, %p47
    %p49 = scmp.ne.s32.totalorder %s38, %s39
    %p50 = scmp.eq.s32.totalorder %s16, 0
    %p51 = por %p49, %p50
    %p52 = scmp.ne.s32.totalorder %s38, %s39
    %p53 = scmp.eq.s32.totalorder %s17, 1
    %p54 = por %p52, %p53
    %p56 = scmp.ne.s32.totalorder %s39, %s55
    %p57 = scmp.eq.s32.totalorder %s17, 0
    %p58 = por %p56, %p57
    %s59 = ssub.s32 %s18, %s30
    %p60 = scmp.eq.s32.totalorder %s59, 0
    %s62 = sadd.s32 %s61, 1
    %s63 = scalar_select %p60, %s61, %s62
    %p66 = pneg %p60
    %p67 = scmp.eq.s32.totalorder %s11, 1
    %p68 = por %p66, %p67
    %p69 = scmp.ne.s32.totalorder %s61, %s64
    %p70 = scmp.eq.s32.totalorder %s11, 0
    %p71 = por %p69, %p70
    %p72 = scmp.ne.s32.totalorder %s61, %s64
    %p73 = scmp.eq.s32.totalorder %s16, 1
    %p74 = por %p72, %p73
    %p75 = scmp.ne.s32.totalorder %s64, %s65
    %p76 = scmp.eq.s32.totalorder %s16, 0
    %p77 = por %p75, %p76
    %p78 = scmp.ne.s32.totalorder %s64, %s65
    %p79 = scmp.eq.s32.totalorder %s17, 1
    %p80 = por %p78, %p79
    %p82 = scmp.ne.s32.totalorder %s65, %s81
    %p83 = scmp.eq.s32.totalorder %s17, 0
    %p84 = por %p82, %p83
    %s85 = ssub.s32 %s18, %s30
    %p86 = scmp.eq.s32.totalorder %s85, 0
    %s88 = sadd.s32 %s87, 1
    %s89 = scalar_select %p86, %s87, %s88
    %p92 = pneg %p86
    %p93 = scmp.eq.s32.totalorder %s11, 1
    %p94 = por %p92, %p93
    %p95 = scmp.ne.s32.totalorder %s87, %s90
    %p96 = scmp.eq.s32.totalorder %s11, 0
    %p97 = por %p95, %p96
    %p98 = scmp.ne.s32.totalorder %s87, %s90
    %p99 = scmp.eq.s32.totalorder %s16, 1
    %p100 = por %p98, %p99
    %p101 = scmp.ne.s32.totalorder %s90, %s91
    %p102 = scmp.eq.s32.totalorder %s16, 0
    %p103 = por %p101, %p102
    %p104 = scmp.ne.s32.totalorder %s90, %s91
    %p105 = scmp.eq.s32.totalorder %s17, 1
    %p106 = por %p104, %p105
    %p108 = scmp.ne.s32.totalorder %s91, %s107
    %p109 = scmp.eq.s32.totalorder %s17, 0
    %p110 = por %p108, %p109
    %s111 = ssub.s32 %s18, %s30
    %s112 = ssub.s32 %s19, %s26
    %s113 = sor.u32 %s111, %s112
    %p114 = scmp.eq.s32.totalorder %s113, 0
    %s116 = sadd.s32 %s115, 1
    %s117 = scalar_select %p114, %s115, %s116
    %p120 = pneg %p114
    %p121 = scmp.eq.s32.totalorder %s11, 1
    %p122 = por %p120, %p121
    %p123 = scmp.ne.s32.totalorder %s115, %s118
    %p124 = scmp.eq.s32.totalorder %s11, 0
    %p125 = por %p123, %p124
    %p126 = scmp.ne.s32.totalorder %s115, %s118
    %p127 = scmp.eq.s32.totalorder %s16, 1
    %p128 = por %p126, %p127
    %p129 = scmp.ne.s32.totalorder %s118, %s119
    %p130 = scmp.eq.s32.totalorder %s16, 0
    %p131 = por %p129, %p130
    %p132 = scmp.ne.s32.totalorder %s118, %s119
    %p133 = scmp.eq.s32.totalorder %s17, 1
    %p134 = por %p132, %p133
    %p136 = scmp.ne.s32.totalorder %s119, %s135
    %p137 = scmp.eq.s32.totalorder %s17, 0
    %p138 = por %p136, %p137
    %s139 = ssub.s32 %s18, %s30
    %s140 = ssub.s32 %s19, %s26
    %s141 = sor.u32 %s139, %s140
    %p142 = scmp.eq.s32.totalorder %s141, 0
    %s144 = sadd.s32 %s143, 1
    %s145 = scalar_select %p142, %s143, %s144
    %p148 = pneg %p142
    %p149 = scmp.eq.s32.totalorder %s11, 1
    %p150 = por %p148, %p149
    %p151 = scmp.ne.s32.totalorder %s143, %s146
    %p152 = scmp.eq.s32.totalorder %s11, 0
    %p153 = por %p151, %p152
    %p154 = scmp.ne.s32.totalorder %s143, %s146
    %p155 = scmp.eq.s32.totalorder %s16, 1
    %p156 = por %p154, %p155
    %p157 = scmp.ne.s32.totalorder %s146, %s147
    %p158 = scmp.eq.s32.totalorder %s16, 0
    %p159 = por %p157, %p158
    %p160 = scmp.ne.s32.totalorder %s146, %s147
    %p161 = scmp.eq.s32.totalorder %s17, 1
    %p162 = por %p160, %p161
    %p164 = scmp.ne.s32.totalorder %s147, %s163
    %p165 = scmp.eq.s32.totalorder %s17, 0
    %p166 = por %p164, %p165
    %p167 = scmp.le.s32.totalorder 1, %s11
    %p168 = scmp.lt.s32.totalorder %s11, 3
    %p169 = pnand %p167, %p168
    %p170 = pneg %p169
    // Predicated region
    $region9: #{grid_v2_forward.1} parent=5 // pred_check
      _
    $region10: #{grid_v2_forward.1} parent=5 // pred_check_branch
      %172 = sbr.rel (%p169) target = $region12
    $region11: #{grid_v2_forward.1} parent=5 // pred_region
      %s173 = ssub.s32 %s11, 1
    $region12: #{grid_v2_forward.1} parent=5 // pred_fallthru
      _
    %p174 = scmp.lt.s32.totalorder %s11, 2
    // Predicated region
    $region13: #{grid_v2_forward.1} parent=5 // pred_check
      %p175 = pneg %p174
    $region14: #{grid_v2_forward.1} parent=5 // pred_check_branch
      %177 = sbr.rel (%p175) target = $region16
    $region15: #{grid_v2_forward.1} parent=5 // pred_region
      // Predicated region
      $region17: #{grid_v2_forward.1} parent=15 // pred_check
        %p178 = pneg %p45
      $region18: #{grid_v2_forward.1} parent=15 // pred_check_branch
        %180 = sbr.rel (%p178) target = $region20
      $region19: #{grid_v2_forward.1} parent=15 // pred_region
        %s181 = smul.u32 2, %s19
        %p182 = scmp.lt.s32.totalorder %s18, 1
        %s183 = scalar_select %p182, %s18, 1
        %p184 = scmp.lt.s32.totalorder %s181, 1
        %s185 = scalar_select %p184, %s181, 1
        %s186 = smul.addr %s185, 8
        %s187 = smul.addr %s183, 16
        %s188 = sadd.s32 %s186, %s187
        %s189 = smul.addr %s188, 8
        %s190 = scalar_lea.vmem %s0, %s189
        %s191 = smul.u32 2, %s19
      $region20: #{grid_v2_forward.1} parent=15 // pred_fallthru
        _
      // Predicated region
      $region21: #{grid_v2_forward.1} parent=15 // pred_check
        %p192 = pneg %p71
      $region22: #{grid_v2_forward.1} parent=15 // pred_check_branch
        %194 = sbr.rel (%p192) target = $region24
      $region23: #{grid_v2_forward.1} parent=15 // pred_region
        %p195 = scmp.lt.s32.totalorder %s18, 1
        %s196 = scalar_select %p195, %s18, 1
        %s197 = smul.addr %s196, 8
        %s198 = scalar_lea.vmem %s1, %s197
      $region24: #{grid_v2_forward.1} parent=15 // pred_fallthru
        _
      // Predicated region
      $region25: #{grid_v2_forward.1} parent=15 // pred_check
        %p199 = pneg %p97
      $region26: #{grid_v2_forward.1} parent=15 // pred_check_branch
        %201 = sbr.rel (%p199) target = $region28
      $region27: #{grid_v2_forward.1} parent=15 // pred_region
        %p202 = scmp.lt.s32.totalorder %s18, 1
        %s203 = scalar_select %p202, %s18, 1
        %s204 = smul.addr %s203, 8
        %s205 = smul.addr %s204, 4
        %s206 = scalar_lea.vmem %s2, %s205
      $region28: #{grid_v2_forward.1} parent=15 // pred_fallthru
        _
    $region16: #{grid_v2_forward.1} parent=5 // pred_fallthru
      _
    %p207 = scmp.le.s32.totalorder 1, %s11
    %p208 = scmp.lt.s32.totalorder %s11, 3
    %p209 = pnand %p207, %p208
    %p210 = pneg %p209
    // Predicated region
    $region29: #{grid_v2_forward.1} parent=5 // pred_check
      _
    $region30: #{grid_v2_forward.1} parent=5 // pred_check_branch
      %212 = sbr.rel (%p209) target = $region32
    $region31: #{grid_v2_forward.1} parent=5 // pred_region
      %s213 = ssub.s32 %s11, 1
      %s214 = smul.u32 2, %s21
      %p215 = scmp.lt.s32.totalorder %s20, 1
      %s216 = scalar_select %p215, %s20, 1
      %p217 = scmp.lt.s32.totalorder %s214, 1
      %s218 = scalar_select %p217, %s214, 1
      %s219 = smul.addr %s218, 8
      %s220 = smul.addr %s216, 16
      %s221 = sadd.s32 %s219, %s220
      %s222 = smul.addr %s221, 8
      %s223 = scalar_lea.vmem %s0, %s222
      %p224 = pneg %p51
      %p225 = pneg %p48
      %p226 = scmp.lt.s32.totalorder %s20, 1
      %s227 = scalar_select %p226, %s20, 1
      %s228 = smul.addr %s227, 8
      %s229 = scalar_lea.vmem %s1, %s228
      %p230 = pneg %p77
      %p231 = pneg %p74
      %p232 = scmp.lt.s32.totalorder %s20, 1
      %s233 = scalar_select %p232, %s20, 1
      %s234 = smul.addr %s233, 8
      %s235 = smul.addr %s234, 4
      %s236 = scalar_lea.vmem %s2, %s235
      %p237 = pneg %p103
      %p238 = pneg %p100
      %p239 = pneg %p131
      %p240 = pneg %p128
      %p241 = scmp.lt.s32.totalorder %s20, 1
      %s242 = scalar_select %p241, %s20, 1
      %p243 = scmp.lt.s32.totalorder %s21, 0
      %s244 = scalar_select %p243, %s21, 0
      %s245 = sadd.s32 %s244, %s242
      %s246 = smul.addr %s245, 8
      %s247 = scalar_lea.vmem %s3, %s246
      %p248 = pneg %p159
      %p249 = pneg %p156
      %s250 = smul.u32 2, %s21
      %p251 = scmp.lt.s32.totalorder %s20, 1
      %s252 = scalar_select %p251, %s20, 1
      %p253 = scmp.lt.s32.totalorder %s250, 1
      %s254 = scalar_select %p253, %s250, 1
      %s255 = smul.addr %s254, 8
      %s256 = smul.addr %s252, 16
      %s257 = sadd.s32 %s255, %s256
      %s258 = smul.addr %s257, 8
      %s259 = scalar_lea.vmem %s4, %s258
      %s260 = smul.u32 2, %s21
      %p261 = scmp.lt.s32.totalorder %s20, 1
      %s262 = scalar_select %p261, %s20, 1
      %p263 = scmp.lt.s32.totalorder %s260, 1
      %s264 = scalar_select %p263, %s260, 1
      %s265 = smul.addr %s264, 8
      %s266 = smul.addr %s262, 16
      %s267 = sadd.s32 %s265, %s266
      %s268 = smul.addr %s267, 8
      %s269 = scalar_lea.vmem %s0, %s268
      %s270 = smul.u32 2, %s21
      %p271 = scmp.lt.s32.totalorder %s20, 1
      %s272 = scalar_select %p271, %s20, 1
      %s273 = smul.addr %s272, 8
      %s274 = scalar_lea.vmem %s1, %s273
      %p275 = scmp.lt.s32.totalorder %s20, 1
      %s276 = scalar_select %p275, %s20, 1
      %s277 = smul.addr %s276, 8
      %s278 = smul.addr %s277, 4
      %s279 = scalar_lea.vmem %s2, %s278
      %p280 = scmp.lt.s32.totalorder %s20, 1
      %s281 = scalar_select %p280, %s20, 1
      %p282 = scmp.lt.s32.totalorder %s21, 0
      %s283 = scalar_select %p282, %s21, 0
      %s284 = sadd.s32 %s283, %s281
      %s285 = smul.addr %s284, 8
      %s286 = scalar_lea.vmem %s3, %s285
      %s287 = smul.u32 2, %s21
      %p288 = scmp.lt.s32.totalorder %s20, 1
      %s289 = scalar_select %p288, %s20, 1
      %p290 = scmp.lt.s32.totalorder %s287, 1
      %s291 = scalar_select %p290, %s287, 1
      %s292 = smul.addr %s291, 8
      %s293 = smul.addr %s289, 16
      %s294 = sadd.s32 %s292, %s293
      %s295 = smul.addr %s294, 8
      %s296 = scalar_lea.vmem %s4, %s295
      %s297 = smul.u32 2, %s21
      %v299 = vld [vmem:[%s269] sm:$0xff]
      %v300 = vld [vmem:[%s269 + $0x8] sm:$0xff]
      %v301 = vld [vmem:[%s269 + $0x10] sm:$0xff]
      %v302 = vld [vmem:[%s269 + $0x18] sm:$0xff]
      %v303 = vld [vmem:[%s269 + $0x20] sm:$0xff]
      %v304 = vld [vmem:[%s269 + $0x28] sm:$0xff]
      %v305 = vld [vmem:[%s269 + $0x30] sm:$0xff]
      %v306 = vld [vmem:[%s269 + $0x38] sm:$0xff]
      %v307 = vld [vmem:[%s269 + $0x40] sm:$0xff]
      %v308 = vld [vmem:[%s269 + $0x48] sm:$0xff]
      %v309 = vld [vmem:[%s269 + $0x50] sm:$0xff]
      %v310 = vld [vmem:[%s269 + $0x58] sm:$0xff]
      %v311 = vld [vmem:[%s269 + $0x60] sm:$0xff]
      %v312 = vld [vmem:[%s269 + $0x68] sm:$0xff]
      %v313 = vld [vmem:[%s269 + $0x70] sm:$0xff]
      %v314 = vld [vmem:[%s269 + $0x78] sm:$0xff]
      %v315 = vld [vmem:[%s274] sm:$0xff]
      %v317 = vlaneseq
      %v318 = vshrl.u32 %v317, 7
      %v319 = vsub.s32 0, %v318
      %v320 = vrot.slane %v315, %v319
      %v321 = vlaneseq
      %v322 = vshrl.u32 %v321, 7
      %v323 = vsub.s32 1, %v322
      %v324 = vrot.slane %v315, %v323
      %v325 = vlaneseq
      %v326 = vshrl.u32 %v325, 7
      %v327 = vsub.s32 2, %v326
      %v328 = vrot.slane %v315, %v327
      %v329 = vlaneseq
      %v330 = vshrl.u32 %v329, 7
      %v331 = vsub.s32 3, %v330
      %v332 = vrot.slane %v315, %v331
      %v333 = vlaneseq
      %v334 = vshrl.u32 %v333, 7
      %v335 = vsub.s32 4, %v334
      %v336 = vrot.slane %v315, %v335
      %v337 = vlaneseq
      %v338 = vshrl.u32 %v337, 7
      %v339 = vsub.s32 5, %v338
      %v340 = vrot.slane %v315, %v339
      %v341 = vlaneseq
      %v342 = vshrl.u32 %v341, 7
      %v343 = vsub.s32 6, %v342
      %v344 = vrot.slane %v315, %v343
      %v345 = vlaneseq
      %v346 = vshrl.u32 %v345, 7
      %v347 = vsub.s32 7, %v346
      %v348 = vrot.slane %v315, %v347
      %v357 = vadd.f32 %v299, %v320
      %v358 = vadd.f32 %v300, %v324
      %v359 = vadd.f32 %v301, %v328
      %v360 = vadd.f32 %v302, %v332
      %v361 = vadd.f32 %v303, %v336
      %v362 = vadd.f32 %v304, %v340
      %v363 = vadd.f32 %v305, %v344
      %v364 = vadd.f32 %v306, %v348
      %v365 = vadd.f32 %v307, %v320
      %v366 = vadd.f32 %v308, %v324
      %v367 = vadd.f32 %v309, %v328
      %v368 = vadd.f32 %v310, %v332
      %v369 = vadd.f32 %v311, %v336
      %v370 = vadd.f32 %v312, %v340
      %v371 = vadd.f32 %v313, %v344
      %v372 = vadd.f32 %v314, %v348
      %v373 = vmax.f32 %v357, %v359
      %v374 = vmax.f32 %v358, %v360
      %v375 = vmax.f32 %v373, %v361
      %v376 = vmax.f32 %v374, %v362
      %v377 = vmax.f32 %v375, %v363
      %v378 = vmax.f32 %v376, %v364
      %v379 = vmax.f32 %v377, %v378
      %380 = vmax.xlane.f32.xlu0 %v379
      %v381 = vpop.xlane.xlu0 %380
      %v382 = vmax.f32 %v365, %v367
      %v383 = vmax.f32 %v366, %v368
      %v384 = vmax.f32 %v382, %v369
      %v385 = vmax.f32 %v383, %v370
      %v386 = vmax.f32 %v384, %v371
      %v387 = vmax.f32 %v385, %v372
      %v388 = vmax.f32 %v386, %v387
      %389 = vmax.xlane.f32.xlu0 %v388
      %v390 = vpop.xlane.xlu0 %389
      %v391 = vsub.f32 %v357, %v381
      %v392 = vsub.f32 %v358, %v381
      %v393 = vsub.f32 %v359, %v381
      %v394 = vsub.f32 %v360, %v381
      %v395 = vsub.f32 %v361, %v381
      %v396 = vsub.f32 %v362, %v381
      %v397 = vsub.f32 %v363, %v381
      %v398 = vsub.f32 %v364, %v381
      %v399 = vsub.f32 %v365, %v390
      %v400 = vsub.f32 %v366, %v390
      %v401 = vsub.f32 %v367, %v390
      %v402 = vsub.f32 %v368, %v390
      %v403 = vsub.f32 %v369, %v390
      %v404 = vsub.f32 %v370, %v390
      %v405 = vsub.f32 %v371, %v390
      %v406 = vsub.f32 %v372, %v390
      %v407 = vmul.f32 %v391, 1.442695
      %v408 = vpow.pop %v407
      %v409 = vmul.f32 %v392, 1.442695
      %v410 = vpow.pop %v409
      %v411 = vmul.f32 %v393, 1.442695
      %v412 = vpow.pop %v411
      %v413 = vmul.f32 %v394, 1.442695
      %v414 = vpow.pop %v413
      %v415 = vmul.f32 %v395, 1.442695
      %v416 = vpow.pop %v415
      %v417 = vmul.f32 %v396, 1.442695
      %v418 = vpow.pop %v417
      %v419 = vmul.f32 %v397, 1.442695
      %v420 = vpow.pop %v419
      %v421 = vmul.f32 %v398, 1.442695
      %v422 = vpow.pop %v421
      %v423 = vmul.f32 %v399, 1.442695
      %v424 = vpow.pop %v423
      %v425 = vmul.f32 %v400, 1.442695
      %v426 = vpow.pop %v425
      %v427 = vmul.f32 %v401, 1.442695
      %v428 = vpow.pop %v427
      %v429 = vmul.f32 %v402, 1.442695
      %v430 = vpow.pop %v429
      %v431 = vmul.f32 %v403, 1.442695
      %v432 = vpow.pop %v431
      %v433 = vmul.f32 %v404, 1.442695
      %v434 = vpow.pop %v433
      %v435 = vmul.f32 %v405, 1.442695
      %v436 = vpow.pop %v435
      %v437 = vmul.f32 %v406, 1.442695
      %v438 = vpow.pop %v437
      %v439 = vadd.f32 %v408, %v410
      %v440 = vadd.f32 %v439, %v412
      %v441 = vadd.f32 %v440, %v414
      %v442 = vadd.f32 %v441, %v416
      %v443 = vadd.f32 %v442, %v418
      %v444 = vadd.f32 %v443, %v420
      %v445 = vadd.f32 %v444, %v422
      %446 = vadd.xlane.f32.xlu0 %v445
      %v447 = vpop.xlane.xlu0 %446
      %v448 = vadd.f32 %v424, %v426
      %v449 = vadd.f32 %v448, %v428
      %v450 = vadd.f32 %v449, %v430
      %v451 = vadd.f32 %v450, %v432
      %v452 = vadd.f32 %v451, %v434
      %v453 = vadd.f32 %v452, %v436
      %v454 = vadd.f32 %v453, %v438
      %455 = vadd.xlane.f32.xlu0 %v454
      %v456 = vpop.xlane.xlu0 %455
      %v457 = vrcp.pop %v447
      %v458 = vrcp.pop %v456
      %v459 = vmul.f32 %v447, %v457
      %v460 = vmul.f32 %v456, %v458
      %v461 = vsub.f32 2.0, %v459
      %v462 = vsub.f32 2.0, %v460
      %v463 = vmul.f32 %v457, %v461
      %v464 = vmul.f32 %v458, %v462
      %v465 = vmul.f32 %v408, %v463
      %v466 = vmul.f32 %v410, %v463
      %v467 = vmul.f32 %v412, %v463
      %v468 = vmul.f32 %v414, %v463
      %v469 = vmul.f32 %v416, %v463
      %v470 = vmul.f32 %v418, %v463
      %v471 = vmul.f32 %v420, %v463
      %v472 = vmul.f32 %v422, %v463
      %v473 = vmul.f32 %v424, %v464
      %v474 = vmul.f32 %v426, %v464
      %v475 = vmul.f32 %v428, %v464
      %v476 = vmul.f32 %v430, %v464
      %v477 = vmul.f32 %v432, %v464
      %v478 = vmul.f32 %v434, %v464
      %v479 = vmul.f32 %v436, %v464
      %v480 = vmul.f32 %v438, %v464
      %481 = vst [vmem:[%s296] sm:$0xff] %v465
      %482 = vst [vmem:[%s296 + $0x8] sm:$0xff] %v466
      %483 = vst [vmem:[%s296 + $0x10] sm:$0xff] %v467
      %484 = vst [vmem:[%s296 + $0x18] sm:$0xff] %v468
      %485 = vst [vmem:[%s296 + $0x20] sm:$0xff] %v469
      %486 = vst [vmem:[%s296 + $0x28] sm:$0xff] %v470
      %487 = vst [vmem:[%s296 + $0x30] sm:$0xff] %v471
      %488 = vst [vmem:[%s296 + $0x38] sm:$0xff] %v472
      %489 = vst [vmem:[%s296 + $0x40] sm:$0xff] %v473
      %490 = vst [vmem:[%s296 + $0x48] sm:$0xff] %v474
      %491 = vst [vmem:[%s296 + $0x50] sm:$0xff] %v475
      %492 = vst [vmem:[%s296 + $0x58] sm:$0xff] %v476
      %493 = vst [vmem:[%s296 + $0x60] sm:$0xff] %v477
      %494 = vst [vmem:[%s296 + $0x68] sm:$0xff] %v478
      %495 = vst [vmem:[%s296 + $0x70] sm:$0xff] %v479
      %496 = vst [vmem:[%s296 + $0x78] sm:$0xff] %v480
      %v497 = vld [vmem:[%s279] sm:$0xff]
      %v498 = vld [vmem:[%s279 + $0x8] sm:$0xff]
      %v499 = vld [vmem:[%s279 + $0x10] sm:$0xff]
      %v500 = vld [vmem:[%s279 + $0x18] sm:$0xff]
      %v501 = vpack.c.bf16 %v473, %v465
      %v502 = vpack.c.bf16 %v474, %v466
      %v503 = vpack.c.bf16 %v475, %v467
      %v504 = vpack.c.bf16 %v476, %v468
      %v505 = vpack.c.bf16 %v477, %v469
      %v506 = vpack.c.bf16 %v478, %v470
      %v507 = vpack.c.bf16 %v479, %v471
      %v508 = vpack.c.bf16 %v480, %v472
      %v513 = vunpack.c.l.b16 %v497
      %v514 = vunpack.c.h.b16 %v497
      %v515 = vunpack.c.l.b16 %v498
      %v516 = vunpack.c.h.b16 %v498
      %v517 = vunpack.c.l.b16 %v499
      %v518 = vunpack.c.h.b16 %v499
      %v519 = vunpack.c.l.b16 %v500
      %v520 = vunpack.c.h.b16 %v500
      %v521 = vpack.c.b16 %v513, %v513
      %v522 = vpack.c.b16 %v514, %v514
      %v523 = vpack.c.b16 %v515, %v515
      %v524 = vpack.c.b16 %v516, %v516
      %v525 = vpack.c.b16 %v517, %v517
      %v526 = vpack.c.b16 %v518, %v518
      %v527 = vpack.c.b16 %v519, %v519
      %v528 = vpack.c.b16 %v520, %v520
      %537 = vmatprep.subr.bf16.mxu0 %v502
      %538 = vmatpush1.bf16.xpose.msra.mxu0 %v501
      %539 = vmatprep.subr.bf16.mxu0 0
      %540 = vmatpush1.bf16.xpose.msra.mxu0 0
      %541 = vmatprep.subr.bf16.mxu0 0
      %542 = vmatpush1.bf16.xpose.msra.mxu0 0
      %543 = vmatprep.subr.bf16.mxu0 0
      %544 = vmatpush1.bf16.xpose.msra.mxu0 0
      %545 = vmatprep.subr.bf16.mxu0 0
      %546 = vmatpush1.bf16.xpose.msra.mxu0 0
      %547 = vmatprep.subr.bf16.mxu0 0
      %548 = vmatpush1.bf16.xpose.msra.mxu0 0
      %549 = vmatprep.subr.bf16.mxu0 0
      %550 = vmatpush1.bf16.xpose.msra.mxu0 0
      %551 = vmatprep.subr.bf16.mxu0 0
      %552 = vmatpush1.bf16.xpose.msra.mxu0 0
      %553 = vmatprep.subr.bf16.mxu0 0
      %554 = vmatpush1.bf16.xpose.msra.mxu0 0
      %555 = vmatprep.subr.bf16.mxu0 0
      %556 = vmatpush1.bf16.xpose.msra.mxu0 0
      %557 = vmatprep.subr.bf16.mxu0 0
      %558 = vmatpush1.bf16.xpose.msra.mxu0 0
      %559 = vmatprep.subr.bf16.mxu0 0
      %560 = vmatpush1.bf16.xpose.msra.mxu0 0
      %561 = vmatprep.subr.bf16.mxu0 0
      %562 = vmatpush1.bf16.xpose.msra.mxu0 0
      %563 = vmatprep.subr.bf16.mxu0 0
      %564 = vmatpush1.bf16.xpose.msra.mxu0 0
      %565 = vmatprep.subr.bf16.mxu0 0
      %566 = vmatpush1.bf16.xpose.msra.mxu0 0
      %567 = vmatprep.subr.bf16.mxu0 0
      %568 = vmatpush1.bf16.xpose.msra.mxu0 0
      %569 = vmatprep.mubr.bf16.mxu0 %v522
      %570 = vmatmul.mubr.bf16.gmra.mrb[0].mxu0 %v521
      %v571 = vpop.f32.mrb[0].mxu0
      %v572 = vadd.f32 0.0, %v571
      %v573 = vpop.f32.mrb[0].mxu0
      %v574 = vpop.f32.mrb[0].mxu0
      %v575 = vpop.f32.mrb[0].mxu0
      %576 = vdwg.mxu0
      %577 = vmatprep.subr.bf16.mxu0 %v504
      %578 = vmatpush1.bf16.xpose.msra.mxu0 %v503
      %579 = vmatprep.subr.bf16.mxu0 0
      %580 = vmatpush1.bf16.xpose.msra.mxu0 0
      %581 = vmatprep.subr.bf16.mxu0 0
      %582 = vmatpush1.bf16.xpose.msra.mxu0 0
      %583 = vmatprep.subr.bf16.mxu0 0
      %584 = vmatpush1.bf16.xpose.msra.mxu0 0
      %585 = vmatprep.subr.bf16.mxu0 0
      %586 = vmatpush1.bf16.xpose.msra.mxu0 0
      %587 = vmatprep.subr.bf16.mxu0 0
      %588 = vmatpush1.bf16.xpose.msra.mxu0 0
      %589 = vmatprep.subr.bf16.mxu0 0
      %590 = vmatpush1.bf16.xpose.msra.mxu0 0
      %591 = vmatprep.subr.bf16.mxu0 0
      %592 = vmatpush1.bf16.xpose.msra.mxu0 0
      %593 = vmatprep.subr.bf16.mxu0 0
      %594 = vmatpush1.bf16.xpose.msra.mxu0 0
      %595 = vmatprep.subr.bf16.mxu0 0
      %596 = vmatpush1.bf16.xpose.msra.mxu0 0
      %597 = vmatprep.subr.bf16.mxu0 0
      %598 = vmatpush1.bf16.xpose.msra.mxu0 0
      %599 = vmatprep.subr.bf16.mxu0 0
      %600 = vmatpush1.bf16.xpose.msra.mxu0 0
      %601 = vmatprep.subr.bf16.mxu0 0
      %602 = vmatpush1.bf16.xpose.msra.mxu0 0
      %603 = vmatprep.subr.bf16.mxu0 0
      %604 = vmatpush1.bf16.xpose.msra.mxu0 0
      %605 = vmatprep.subr.bf16.mxu0 0
      %606 = vmatpush1.bf16.xpose.msra.mxu0 0
      %607 = vmatprep.subr.bf16.mxu0 0
      %608 = vmatpush1.bf16.xpose.msra.mxu0 0
      %609 = vmatprep.mubr.bf16.mxu0 %v524
      %610 = vmatmul.mubr.bf16.gmra.mrb[0].mxu0 %v523
      %v611 = vpop.f32.mrb[0].mxu0
      %v612 = vadd.f32 %v572, %v611
      %v613 = vpop.f32.mrb[0].mxu0
      %v614 = vpop.f32.mrb[0].mxu0
      %v615 = vpop.f32.mrb[0].mxu0
      %616 = vdwg.mxu0
      %617 = vmatprep.subr.bf16.mxu0 %v506
      %618 = vmatpush1.bf16.xpose.msra.mxu0 %v505
      %619 = vmatprep.subr.bf16.mxu0 0
      %620 = vmatpush1.bf16.xpose.msra.mxu0 0
      %621 = vmatprep.subr.bf16.mxu0 0
      %622 = vmatpush1.bf16.xpose.msra.mxu0 0
      %623 = vmatprep.subr.bf16.mxu0 0
      %624 = vmatpush1.bf16.xpose.msra.mxu0 0
      %625 = vmatprep.subr.bf16.mxu0 0
      %626 = vmatpush1.bf16.xpose.msra.mxu0 0
      %627 = vmatprep.subr.bf16.mxu0 0
      %628 = vmatpush1.bf16.xpose.msra.mxu0 0
      %629 = vmatprep.subr.bf16.mxu0 0
      %630 = vmatpush1.bf16.xpose.msra.mxu0 0
      %631 = vmatprep.subr.bf16.mxu0 0
      %632 = vmatpush1.bf16.xpose.msra.mxu0 0
      %633 = vmatprep.subr.bf16.mxu0 0
      %634 = vmatpush1.bf16.xpose.msra.mxu0 0
      %635 = vmatprep.subr.bf16.mxu0 0
      %636 = vmatpush1.bf16.xpose.msra.mxu0 0
      %637 = vmatprep.subr.bf16.mxu0 0
      %638 = vmatpush1.bf16.xpose.msra.mxu0 0
      %639 = vmatprep.subr.bf16.mxu0 0
      %640 = vmatpush1.bf16.xpose.msra.mxu0 0
      %641 = vmatprep.subr.bf16.mxu0 0
      %642 = vmatpush1.bf16.xpose.msra.mxu0 0
      %643 = vmatprep.subr.bf16.mxu0 0
      %644 = vmatpush1.bf16.xpose.msra.mxu0 0
      %645 = vmatprep.subr.bf16.mxu0 0
      %646 = vmatpush1.bf16.xpose.msra.mxu0 0
      %647 = vmatprep.subr.bf16.mxu0 0
      %648 = vmatpush1.bf16.xpose.msra.mxu0 0
      %649 = vmatprep.mubr.bf16.mxu0 %v526
      %650 = vmatmul.mubr.bf16.gmra.mrb[0].mxu0 %v525
      %v651 = vpop.f32.mrb[0].mxu0
      %v652 = vadd.f32 %v612, %v651
      %v653 = vpop.f32.mrb[0].mxu0
      %v654 = vpop.f32.mrb[0].mxu0
      %v655 = vpop.f32.mrb[0].mxu0
      %656 = vdwg.mxu0
      %657 = vmatprep.subr.bf16.mxu0 %v508
      %658 = vmatpush1.bf16.xpose.msra.mxu0 %v507
      %659 = vmatprep.subr.bf16.mxu0 0
      %660 = vmatpush1.bf16.xpose.msra.mxu0 0
      %661 = vmatprep.subr.bf16.mxu0 0
      %662 = vmatpush1.bf16.xpose.msra.mxu0 0
      %663 = vmatprep.subr.bf16.mxu0 0
      %664 = vmatpush1.bf16.xpose.msra.mxu0 0
      %665 = vmatprep.subr.bf16.mxu0 0
      %666 = vmatpush1.bf16.xpose.msra.mxu0 0
      %667 = vmatprep.subr.bf16.mxu0 0
      %668 = vmatpush1.bf16.xpose.msra.mxu0 0
      %669 = vmatprep.subr.bf16.mxu0 0
      %670 = vmatpush1.bf16.xpose.msra.mxu0 0
      %671 = vmatprep.subr.bf16.mxu0 0
      %672 = vmatpush1.bf16.xpose.msra.mxu0 0
      %673 = vmatprep.subr.bf16.mxu0 0
      %674 = vmatpush1.bf16.xpose.msra.mxu0 0
      %675 = vmatprep.subr.bf16.mxu0 0
      %676 = vmatpush1.bf16.xpose.msra.mxu0 0
      %677 = vmatprep.subr.bf16.mxu0 0
      %678 = vmatpush1.bf16.xpose.msra.mxu0 0
      %679 = vmatprep.subr.bf16.mxu0 0
      %680 = vmatpush1.bf16.xpose.msra.mxu0 0
      %681 = vmatprep.subr.bf16.mxu0 0
      %682 = vmatpush1.bf16.xpose.msra.mxu0 0
      %683 = vmatprep.subr.bf16.mxu0 0
      %684 = vmatpush1.bf16.xpose.msra.mxu0 0
      %685 = vmatprep.subr.bf16.mxu0 0
      %686 = vmatpush1.bf16.xpose.msra.mxu0 0
      %687 = vmatprep.subr.bf16.mxu0 0
      %688 = vmatpush1.bf16.xpose.msra.mxu0 0
      %689 = vmatprep.mubr.bf16.mxu0 %v528
      %690 = vmatmul.mubr.bf16.gmra.mrb[0].mxu0 %v527
      %v691 = vpop.f32.mrb[0].mxu0
      %v692 = vadd.f32 %v652, %v691
      %v693 = vpop.f32.mrb[0].mxu0
      %v694 = vpop.f32.mrb[0].mxu0
      %v695 = vpop.f32.mrb[0].mxu0
      %696 = vdwg.mxu0
      %vm697 = vcmask 130048
      %698 = vst.msk [vmem:[%s286] sm:$0xff] %vm697, %v692
      %p699 = scmp.lt.s32.totalorder %s20, 1
      %s700 = scalar_select %p699, %s20, 1
      %p701 = scmp.lt.s32.totalorder %s21, 0
      %s702 = scalar_select %p701, %s21, 0
      %s703 = sadd.s32 %s702, %s700
      %s704 = smul.addr %s703, 8
      %s705 = scalar_lea.vmem %s3, %s704
      %s706 = smul.u32 2, %s21
      %p707 = scmp.lt.s32.totalorder %s20, 1
      %s708 = scalar_select %p707, %s20, 1
      %p709 = scmp.lt.s32.totalorder %s706, 1
      %s710 = scalar_select %p709, %s706, 1
      %s711 = smul.addr %s710, 8
      %s712 = smul.addr %s708, 16
      %s713 = sadd.s32 %s711, %s712
      %s714 = smul.addr %s713, 8
      %s715 = scalar_lea.vmem %s4, %s714
      // Predicated region
      $region33: #{grid_v2_forward.1} parent=31 // pred_check
        %p716 = pneg %p128
      $region34: #{grid_v2_forward.1} parent=31 // pred_check_branch
        %718 = sbr.rel (%p716) target = $region36
      $region35: #{grid_v2_forward.1} parent=31 // pred_region
        _
      $region36: #{grid_v2_forward.1} parent=31 // pred_fallthru
        _
      // Predicated region
      $region37: #{grid_v2_forward.1} parent=31 // pred_check
        %p719 = pneg %p156
      $region38: #{grid_v2_forward.1} parent=31 // pred_check_branch
        %721 = sbr.rel (%p719) target = $region40
      $region39: #{grid_v2_forward.1} parent=31 // pred_region
        %s722 = smul.u32 2, %s21
      $region40: #{grid_v2_forward.1} parent=31 // pred_fallthru
        _
    $region32: #{grid_v2_forward.1} parent=5 // pred_fallthru
      _
    %p723 = scmp.le.s32.totalorder 2, %s11
    // Predicated region
    $region41: #{grid_v2_forward.1} parent=5 // pred_check
      %p724 = pneg %p723
    $region42: #{grid_v2_forward.1} parent=5 // pred_check_branch
      %726 = sbr.rel (%p724) target = $region44
    $region43: #{grid_v2_forward.1} parent=5 // pred_region
      %s727 = ssub.s32 %s11, 2
      // Predicated region
      $region45: #{grid_v2_forward.1} parent=43 // pred_check
        %p728 = pneg %p134
      $region46: #{grid_v2_forward.1} parent=43 // pred_check_branch
        %730 = sbr.rel (%p728) target = $region48
      $region47: #{grid_v2_forward.1} parent=43 // pred_region
        %p731 = scmp.lt.s32.totalorder %s22, 1
        %s732 = scalar_select %p731, %s22, 1
        %p733 = scmp.lt.s32.totalorder %s23, 0
        %s734 = scalar_select %p733, %s23, 0
        %s735 = sadd.s32 %s734, %s732
        %s736 = smul.addr %s735, 8
        %s737 = scalar_lea.vmem %s3, %s736
      $region48: #{grid_v2_forward.1} parent=43 // pred_fallthru
        _
      // Predicated region
      $region49: #{grid_v2_forward.1} parent=43 // pred_check
        %p738 = pneg %p162
      $region50: #{grid_v2_forward.1} parent=43 // pred_check_branch
        %740 = sbr.rel (%p738) target = $region52
      $region51: #{grid_v2_forward.1} parent=43 // pred_region
        %s741 = smul.u32 2, %s23
        %p742 = scmp.lt.s32.totalorder %s22, 1
        %s743 = scalar_select %p742, %s22, 1
        %p744 = scmp.lt.s32.totalorder %s741, 1
        %s745 = scalar_select %p744, %s741, 1
        %s746 = smul.addr %s745, 8
        %s747 = smul.addr %s743, 16
        %s748 = sadd.s32 %s746, %s747
        %s749 = smul.addr %s748, 8
        %s750 = scalar_lea.vmem %s4, %s749
      $region52: #{grid_v2_forward.1} parent=43 // pred_fallthru
        _
    $region44: #{grid_v2_forward.1} parent=5 // pred_fallthru
      _
  $region6: #{grid_v2_forward.1} parent=0 // loop_footer
    %s15 = sadd.s32 1, %s11
  $region7: #{grid_v2_forward.1} parent=0 // loop_footer_branch
    %10 = sbr.rel target = $region3
  $region8: #{grid_v2_forward.1} parent=0 // loop_exit
    _

</llo_original>
